<compile_context>
chip_gen: v6e
topology: v6e:2x2x1
jax: 0.10.0
libtpu: 0.0.40
codegen_flags: <defaults>
</compile_context>

<pallas_src>
import functools

import jax
import jax.numpy as jnp
from jax.experimental import pallas as pl
from jax.experimental.pallas import tpu as pltpu


_LANE = 128
_SUBLANE = 8
_VMEM_BUDGET_BYTES = 32 << 20        # planned double-buffered working set
_VMEM_LIMIT_BYTES = 48 << 20         # scoped VMEM limit requested from Mosaic
_RESIDENT_WEIGHT_MAX_BYTES = 10 << 20


def _cdiv(a: int, b: int) -> int:
    return (a + b - 1) // b


def _round_up(x: int, m: int) -> int:
    return _cdiv(x, m) * m


def _pick_tile(total: int, unit: int, cap: int) -> int:
    """Largest multiple of `unit` that divides `total` (itself a multiple of
    `unit`) and is <= cap; falls back to `unit`."""
    if total <= cap:
        return total
    best = unit
    t = unit
    while t <= cap:
        if total % t == 0:
            best = t
        t += unit
    return best


def _choose_tm(batch: int, cap: int) -> int:
    mp8 = _round_up(max(batch, 1), _SUBLANE)
    tm = min(cap, 512, mp8)
    if mp8 >= 2 * _SUBLANE:
        # Keep >= 2 M tiles so v7x's 2nd TensorCore has work (no-op on 1-TC chips).
        tm = min(tm, _round_up(_cdiv(mp8, 2), _SUBLANE))
    return max(_SUBLANE, (tm // _SUBLANE) * _SUBLANE)


# --------------------------------------------------------------------------
# Kernels. x_ref: [tm, tk], w_ref: [tk, tn] (weight pre-transposed to [K, N]),
# b_ref: [1, tn], o_ref: [tm, tn]. Grid = (M, N, K), K innermost ("arbitrary").
# --------------------------------------------------------------------------
def _linear_kernel_f32out(x_ref, w_ref, b_ref, o_ref):
    # f32 output: accumulate directly into the revisited output block.
    k = pl.program_id(2)
    part = jnp.dot(x_ref[...], w_ref[...], preferred_element_type=jnp.float32)

    @pl.when(k == 0)
    def _():
        o_ref[...] = part

    @pl.when(k != 0)
    def _():
        o_ref[...] += part

    @pl.when(k == pl.num_programs(2) - 1)
    def _():
        o_ref[...] += b_ref[...]


def _linear_kernel_acc(x_ref, w_ref, b_ref, o_ref, acc_ref):
    # Non-f32 output: accumulate in a f32 VMEM scratch, cast in the epilogue.
    k = pl.program_id(2)

    @pl.when(k == 0)
    def _():
        acc_ref[...] = jnp.zeros_like(acc_ref)

    acc_ref[...] += jnp.dot(x_ref[...], w_ref[...],
                            preferred_element_type=jnp.float32)

    @pl.when(k == pl.num_programs(2) - 1)
    def _():
        o_ref[...] = (acc_ref[...] + b_ref[...]).astype(o_ref.dtype)


# --------------------------------------------------------------------------
# One-time prep of the frozen head (NOT per forward pass).
# --------------------------------------------------------------------------
def prepare_linear_params(weight, bias, *, bf16_matmul: bool = False):
    """weight: [num_labels, dim], bias: [num_labels].
    Returns (w_kn [Kp, Np], bias2d [1, Np] f32, num_labels)."""
    N, K = weight.shape
    Np = _round_up(N, _LANE)
    Kp = _round_up(K, _LANE)
    w = weight
    if (Np, Kp) != (N, K):
        w = jnp.pad(w, ((0, Np - N), (0, Kp - K)))
    w_kn = jnp.transpose(w)                      # [Kp, Np]; HBM transpose paid once
    if bf16_matmul:
        w_kn = w_kn.astype(jnp.bfloat16)         # halves the dominant HBM stream
    b = bias if Np == N else jnp.pad(bias, (0, Np - N))
    b2 = b.reshape(1, Np).astype(jnp.float32)
    return w_kn, b2, N


# --------------------------------------------------------------------------
# Per-call wrapper (takes pre-prepped params).
# --------------------------------------------------------------------------
def linear_classifier_apply(
    x, w_kn, b2, num_labels, *, bf16_matmul: bool = False,
    resident_weight_max_bytes: int = _RESIDENT_WEIGHT_MAX_BYTES,
    max_tn: int = 512, max_tk: int = 2048,
):
    """x: [B, dim]; w_kn: [Kp, Np] (prepped); b2: [1, Np] -> [B, num_labels]."""
    B, K = x.shape
    Kp, Np = w_kn.shape
    assert K <= Kp and num_labels <= Np
    out_dtype = x.dtype

    x_in = x.astype(jnp.bfloat16) if (bf16_matmul and x.dtype != jnp.bfloat16) else x

    x_item = jnp.dtype(x_in.dtype).itemsize
    w_item = jnp.dtype(w_kn.dtype).itemsize
    out_item = jnp.dtype(out_dtype).itemsize
    b_bytes = Np * 4

    # Weight residency: single block with a constant index -> fetched once.
    w_bytes = Kp * Np * w_item
    resident = w_bytes <= resident_weight_max_bytes
    if resident:
        tk, tn = Kp, Np
    else:
        tn = _pick_tile(Np, _LANE, max_tn)
        tk = _pick_tile(Kp, _LANE, max_tk)

    use_acc = out_dtype != jnp.float32

    # Size tm against the VMEM budget (conservatively assume double buffering).
    fixed = 2 * (tk * tn * w_item + b_bytes)
    per_row = 2 * (tk * x_item + tn * out_item) + (tn * 4 if use_acc else 0)
    tm_cap = max(_SUBLANE, (_VMEM_BUDGET_BYTES - fixed) // max(per_row, 1))
    tm = _choose_tm(B, tm_cap)
    Mp = _round_up(B, tm)

    if Kp != K or Mp != B:
        x_in = jnp.pad(x_in, ((0, Mp - B), (0, Kp - K)))

    grid = (Mp // tm, Np // tn, Kp // tk)
    n_m, n_n, n_k = grid

    # Advisory cost: x re-read per N tile, weight re-read per M tile unless resident.
    w_reads = 1 if resident else n_m
    cost = pl.CostEstimate(
        flops=2 * Mp * Kp * Np,
        transcendentals=0,
        bytes_accessed=(n_n * Mp * Kp * x_item
                        + w_reads * Kp * Np * w_item
                        + b_bytes
                        + Mp * Np * out_item),
    )

    in_specs = [
        pl.BlockSpec((tm, tk), lambda i, j, k: (i, k)),   # x  [Mp, Kp]
        pl.BlockSpec((tk, tn), lambda i, j, k: (k, j)),   # W^T [Kp, Np] (const idx when resident)
        pl.BlockSpec((1, tn), lambda i, j, k: (0, j)),    # bias [1, Np]
    ]
    out_spec = pl.BlockSpec((tm, tn), lambda i, j, k: (i, j))

    kernel = _linear_kernel_acc if use_acc else _linear_kernel_f32out
    scratch = [pltpu.VMEM((tm, tn), jnp.float32)] if use_acc else []

    out_padded = pl.pallas_call(
        kernel,
        out_shape=jax.ShapeDtypeStruct((Mp, Np), out_dtype),
        grid_spec=pltpu.PrefetchScalarGridSpec(
            num_scalar_prefetch=0,
            grid=grid,
            in_specs=in_specs,
            out_specs=out_spec,
            scratch_shapes=scratch,
        ),
        compiler_params=pltpu.CompilerParams(
            dimension_semantics=("parallel", "parallel", "arbitrary"),
            vmem_limit_bytes=_VMEM_LIMIT_BYTES,
        ),
        cost_estimate=cost,
    )(x_in, w_kn, b2)

    return out_padded[:B, :num_labels]


def make_linear_classifier(weight, bias, *, bf16_matmul: bool = False):
    """Factory: preps the frozen head once and returns `apply(x)`."""
    w_kn, b2, n_labels = prepare_linear_params(weight, bias, bf16_matmul=bf16_matmul)
    return functools.partial(linear_classifier_apply, w_kn=w_kn, b2=b2,
                             num_labels=n_labels, bf16_matmul=bf16_matmul)


def linear_classifier(x, weight, bias, *, bf16_matmul: bool = False, **overrides):
    """One-shot convenience (preps per call). For a frozen head applied
    repeatedly, prefer make_linear_classifier so pad/transpose/cast is paid once."""
    w_kn, b2, n_labels = prepare_linear_params(weight, bias, bf16_matmul=bf16_matmul)
    return linear_classifier_apply(x, w_kn, b2, n_labels,
                                   bf16_matmul=bf16_matmul, **overrides)


if __name__ == "__main__":
    key = jax.random.PRNGKey(0)
    k1, k2, k3, k4 = jax.random.split(key, 4)

    # 1) Small shapes consistent with the module (classifier head on features).
    B, dim, num_labels = 2, 32, 16
    x = jax.random.normal(k1, (B, dim), dtype=jnp.float32)
    # nn.Linear init in the module: weight ~ N(0, 0.01), bias = 0.
    weight = 0.01 * jax.random.normal(k2, (num_labels, dim), dtype=jnp.float32)
    bias = jnp.zeros((num_labels,), dtype=jnp.float32)

    head = make_linear_classifier(weight, bias)      # one-time weight prep
    out = jax.block_until_ready(head(x))
    ref = x @ weight.T + bias
    assert out.shape == (B, num_labels)
    assert jnp.allclose(out, ref, atol=1e-5, rtol=1e-5)

    # 2) Misaligned shapes + forced tiled fallback (multi N/K grid, revisited
    #    f32 output block used as the accumulator).
    B2, dim2, labels2 = 16, 640, 200
    x2 = jax.random.normal(k3, (B2, dim2), dtype=jnp.float32)
    w2 = 0.01 * jax.random.normal(k4, (labels2, dim2), dtype=jnp.float32)
    b2v = jnp.zeros((labels2,), dtype=jnp.float32)
    ref2 = x2 @ w2.T + b2v

    out2 = jax.block_until_ready(
        linear_classifier(x2, w2, b2v,
                          resident_weight_max_bytes=0,   # force the tiled path
                          max_tn=128, max_tk=256))
    assert out2.shape == (B2, labels2)
    assert jnp.allclose(out2, ref2, atol=1e-4, rtol=1e-4)

    # 3) bf16 fast path: bf16 operands fed to the kernel (prepped weight is
    #    bf16-resident), f32 accumulation + f32 output. Not bit-exact vs f32.
    head_bf16 = make_linear_classifier(w2, b2v, bf16_matmul=True)
    out3 = jax.block_until_ready(head_bf16(x2))
    assert out3.shape == (B2, labels2)
    assert out3.dtype == x2.dtype
    assert jnp.allclose(out3, ref2, atol=5e-3, rtol=5e-2)

    print("KERNEL_OK")
</pallas_src>

<mosaic_0001>
module attributes {stable_mosaic.version = 11 : i64} {
  func.func @_linear_kernel_f32out(%arg0: i32, %arg1: i32, %arg2: i32, %arg3: memref<8x128xf32, #tpu.memory_space<vmem>>, %arg4: memref<128x128xf32, #tpu.memory_space<vmem>>, %arg5: memref<1x128xf32, #tpu.memory_space<vmem>>, %arg6: memref<8x128xf32, #tpu.memory_space<vmem>>) attributes {dimension_semantics = [#tpu.dimension_semantics<parallel>, #tpu.dimension_semantics<parallel>, #tpu.dimension_semantics<arbitrary>], iteration_bounds = array<i64: 1, 1, 1>, scalar_prefetch = 0 : i64, scratch_operands = 0 : i64, tpu.core_type = #tpu.core_type<tc>, window_params = [{transform_indices = @transform_0, window_bounds = array<i64: 8, 128>}, {transform_indices = @transform_1, window_bounds = array<i64: 128, 128>}, {transform_indices = @transform_2, window_bounds = array<i64: 1, 128>}, {transform_indices = @transform_3, window_bounds = array<i64: 8, 128>}]} {
    %c0 = arith.constant 0 : index
    %c0_0 = arith.constant 0 : index
    %0 = vector.load %arg3[%c0, %c0_0] : memref<8x128xf32, #tpu.memory_space<vmem>>, vector<8x128xf32>
    %c0_1 = arith.constant 0 : index
    %c0_2 = arith.constant 0 : index
    %1 = vector.load %arg4[%c0_1, %c0_2] : memref<128x128xf32, #tpu.memory_space<vmem>>, vector<128x128xf32>
    %cst = arith.constant dense<0.000000e+00> : vector<8x128xf32>
    %2 = tpu.matmul %0, %1, %cst {dimension_numbers = #tpu.dot_dimension_numbers<[1], [0], [0], [1], [0, 0, 1, 1], [], []>} : vector<8x128xf32>, vector<128x128xf32>, vector<8x128xf32> -> vector<8x128xf32>
    %c0_i32 = arith.constant 0 : i32
    %3 = arith.cmpi eq, %arg2, %c0_i32 : i32
    %4 = arith.extui %3 : i1 to i32
    %c0_i32_3 = arith.constant 0 : i32
    %5 = arith.cmpi ne, %4, %c0_i32_3 : i32
    scf.if %5 {
      %c0_8 = arith.constant 0 : index
      %c0_9 = arith.constant 0 : index
      %12 = vector.load %arg6[%c0_8, %c0_9] : memref<8x128xf32, #tpu.memory_space<vmem>>, vector<8x128xf32>
      tpu.vector_store %arg6[%c0_8, %c0_9], %2 {strides = array<i32>} : memref<8x128xf32, #tpu.memory_space<vmem>>, vector<8x128xf32>,
    } else {
    }
    %c0_i32_4 = arith.constant 0 : i32
    %6 = arith.cmpi ne, %arg2, %c0_i32_4 : i32
    %7 = arith.extui %6 : i1 to i32
    %c0_i32_5 = arith.constant 0 : i32
    %8 = arith.cmpi ne, %7, %c0_i32_5 : i32
    scf.if %8 {
      %c0_8 = arith.constant 0 : index
      %c0_9 = arith.constant 0 : index
      %12 = vector.load %arg6[%c0_8, %c0_9] : memref<8x128xf32, #tpu.memory_space<vmem>>, vector<8x128xf32>
      %13 = arith.addf %12, %2 : vector<8x128xf32>
      %c0_10 = arith.constant 0 : index
      %c0_11 = arith.constant 0 : index
      %14 = vector.load %arg6[%c0_10, %c0_11] : memref<8x128xf32, #tpu.memory_space<vmem>>, vector<8x128xf32>
      tpu.vector_store %arg6[%c0_10, %c0_11], %13 {strides = array<i32>} : memref<8x128xf32, #tpu.memory_space<vmem>>, vector<8x128xf32>,
    } else {
    }
    %c0_i32_6 = arith.constant 0 : i32
    %9 = arith.cmpi eq, %arg2, %c0_i32_6 : i32
    %10 = arith.extui %9 : i1 to i32
    %c0_i32_7 = arith.constant 0 : i32
    %11 = arith.cmpi ne, %10, %c0_i32_7 : i32
    scf.if %11 {
      %c0_8 = arith.constant 0 : index
      %c0_9 = arith.constant 0 : index
      %12 = vector.load %arg6[%c0_8, %c0_9] : memref<8x128xf32, #tpu.memory_space<vmem>>, vector<8x128xf32>
      %c0_10 = arith.constant 0 : index
      %c0_11 = arith.constant 0 : index
      %13 = vector.load %arg5[%c0_10, %c0_11] : memref<1x128xf32, #tpu.memory_space<vmem>>, vector<1x128xf32>
      %14 = vector.broadcast %13 : vector<1x128xf32> to vector<8x128xf32>
      %15 = arith.addf %12, %14 : vector<8x128xf32>
      %c0_12 = arith.constant 0 : index
      %c0_13 = arith.constant 0 : index
      %16 = vector.load %arg6[%c0_12, %c0_13] : memref<8x128xf32, #tpu.memory_space<vmem>>, vector<8x128xf32>
      tpu.vector_store %arg6[%c0_12, %c0_13], %15 {strides = array<i32>} : memref<8x128xf32, #tpu.memory_space<vmem>>, vector<8x128xf32>,
    } else {
    }
    return
  }
  func.func @transform_0(%arg0: i32, %arg1: i32, %arg2: i32) -> (i32, i32) {
    %c0_i32 = arith.constant 0 : i32
    return %arg0, %arg2 : i32, i32
  }
  func.func @transform_1(%arg0: i32, %arg1: i32, %arg2: i32) -> (i32, i32) {
    %c0_i32 = arith.constant 0 : i32
    return %arg2, %arg1 : i32, i32
  }
  func.func @transform_2(%arg0: i32, %arg1: i32, %arg2: i32) -> (i32, i32) {
    %c0_i32 = arith.constant 0 : i32
    %c0_i32_0 = arith.constant 0 : i32
    return %c0_i32, %arg1 : i32, i32
  }
  func.func @transform_3(%arg0: i32, %arg1: i32, %arg2: i32) -> (i32, i32) {
    %c0_i32 = arith.constant 0 : i32
    return %arg0, %arg1 : i32, i32
  }
}

</mosaic_0001>

<llo_original>
// kernel: tpu_custom_call.1
$region0: #{tpu_custom_call.1}
  #allocation0 [shape = 'u32[]', space=smem, size = 0x4, offset = 0x4, fixed_abs, tag = 'smem constant byte address 0x4 - core index']
  #allocation1 [shape = 'u32[144,128]{1,0:T(1,128)}', space=vmem, size = 0x12000, scoped, tag = 'internal scratch']
  %s0 = inlined_call_operand.hbm [shape: f32[8,128], index: 0, kind: input, shape index: {}]
  %s1 = inlined_call_operand.hbm [shape: f32[128,128], index: 1, kind: input, shape index: {}]
  %s2 = inlined_call_operand.vmem [shape: f32[1,128], index: 2, kind: input, shape index: {}]
  %s3 = inlined_call_operand.hbm [shape: f32[8,128], index: 3, kind: output, shape index: {}]
  %s4 = sld [smem:[#allocation0]]
  $region42: #{tpu_custom_call.1} parent=0
    _
  %s6 = ssub.s32 1, %s4
  %s7 = scalar_select 0, %s6, %s4
  $region1: #{tpu_custom_call.1} parent=0
    #allocation2 [shape = 'u8[4096]{0}', space=vmem, size = 0x1000, scoped, tag = 'input window, operand 0, single buffered']
    #allocation3 [shape = 's32[1]{0}', space=sflag, size = 0x4, scoped, tag = 'scoped memory for tpu_custom_call.1']
    #allocation4 [shape = 's32[1]{0}', space=sflag, size = 0x4, scoped, tag = 'scoped memory for tpu_custom_call.1']
    #allocation5 [shape = 'u8[65536]{0}', space=vmem, size = 0x10000, scoped, tag = 'input window, operand 1, single buffered']
    #allocation6 [shape = 's32[1]{0}', space=sflag, size = 0x4, scoped, tag = 'scoped memory for tpu_custom_call.1']
    #allocation7 [shape = 'u8[4096]{0}', space=vmem, size = 0x1000, scoped, tag = 'output window, operand 0, single buffered']
    %8 = vsyncpa [#allocation3], 0
    %9 = vsyncpa [#allocation6], 0
    %10 = vsyncpa [#allocation4], 0
    // Predicated region
    $region2: #{tpu_custom_call.1} parent=1 // pred_check
      _
    $region3: #{tpu_custom_call.1} parent=1 // pred_check_branch
      %12 = sbr.rel (0) target = $region5
    $region4: #{tpu_custom_call.1} parent=1 // pred_region
      %s14 = ssub.s32 128, 128
      %15 = vsyncadd [#allocation3], %s14
      %s17 = sshll.u32 [#allocation2], 4
      %s18 = int_to_ptr.vmem [resolvable:$true] %s17
      %20 = dma.hbm_to_vmem [thread:$0]  %s0, 128, %s18, [#allocation3]
    $region5: #{tpu_custom_call.1} parent=1 // pred_fallthru
      _
    // Predicated region
    $region6: #{tpu_custom_call.1} parent=1 // pred_check
      _
    $region7: #{tpu_custom_call.1} parent=1 // pred_check_branch
      %22 = sbr.rel (0) target = $region9
    $region8: #{tpu_custom_call.1} parent=1 // pred_region
      %s24 = ssub.s32 2048, 2048
      %25 = vsyncadd [#allocation6], %s24
      %s26 = sshll.u32 [#allocation5], 4
      %s27 = int_to_ptr.vmem [resolvable:$true] %s26
      %32 = dma.hbm_to_vmem [thread:$0]  %s1, 2048, %s27, [#allocation6], 128, 128, 8
    $region9: #{tpu_custom_call.1} parent=1 // pred_fallthru
      _
    // Predicated region
    $region10: #{tpu_custom_call.1} parent=1 // pred_check
      _
    $region11: #{tpu_custom_call.1} parent=1 // pred_check_branch
      %34 = sbr.rel (0) target = $region13
    $region12: #{tpu_custom_call.1} parent=1 // pred_region
      _
    $region13: #{tpu_custom_call.1} parent=1 // pred_fallthru
      _
    // Predicated region
    $region14: #{tpu_custom_call.1} parent=1 // pred_check
      _
    $region15: #{tpu_custom_call.1} parent=1 // pred_check_branch
      %36 = sbr.rel (0) target = $region17
    $region16: #{tpu_custom_call.1} parent=1 // pred_region
      %37 = dma.done [#allocation3], 128
    $region17: #{tpu_custom_call.1} parent=1 // pred_fallthru
      _
    // Predicated region
    $region18: #{tpu_custom_call.1} parent=1 // pred_check
      _
    $region19: #{tpu_custom_call.1} parent=1 // pred_check_branch
      %39 = sbr.rel (0) target = $region21
    $region20: #{tpu_custom_call.1} parent=1 // pred_region
      %40 = dma.done [#allocation6], 2048
    $region21: #{tpu_custom_call.1} parent=1 // pred_fallthru
      _
    %v41 = vld [vmem:[#allocation2] sm:$0xff]
    %v42 = vld [vmem:[#allocation5] sm:$0xff]
    %v43 = vld [vmem:[#allocation5 + $0x8] sm:$0xff]
    %v44 = vld [vmem:[#allocation5 + $0x10] sm:$0xff]
    %v45 = vld [vmem:[#allocation5 + $0x18] sm:$0xff]
    %v46 = vld [vmem:[#allocation5 + $0x20] sm:$0xff]
    %v47 = vld [vmem:[#allocation5 + $0x28] sm:$0xff]
    %v48 = vld [vmem:[#allocation5 + $0x30] sm:$0xff]
    %v49 = vld [vmem:[#allocation5 + $0x38] sm:$0xff]
    %v50 = vld [vmem:[#allocation5 + $0x40] sm:$0xff]
    %v51 = vld [vmem:[#allocation5 + $0x48] sm:$0xff]
    %v52 = vld [vmem:[#allocation5 + $0x50] sm:$0xff]
    %v53 = vld [vmem:[#allocation5 + $0x58] sm:$0xff]
    %v54 = vld [vmem:[#allocation5 + $0x60] sm:$0xff]
    %v55 = vld [vmem:[#allocation5 + $0x68] sm:$0xff]
    %v56 = vld [vmem:[#allocation5 + $0x70] sm:$0xff]
    %v57 = vld [vmem:[#allocation5 + $0x78] sm:$0xff]
    %58 = vmatprep.subr.mxu0 0.0
    %59 = vmatpush1.msra.mxu0 %v57
    %60 = vmatprep.subr.mxu0 0.0
    %61 = vmatpush1.msra.mxu0 %v56
    %62 = vmatprep.subr.mxu0 0.0
    %63 = vmatpush1.msra.mxu0 %v55
    %64 = vmatprep.subr.mxu0 0.0
    %65 = vmatpush1.msra.mxu0 %v54
    %66 = vmatprep.subr.mxu0 0.0
    %67 = vmatpush1.msra.mxu0 %v53
    %68 = vmatprep.subr.mxu0 0.0
    %69 = vmatpush1.msra.mxu0 %v52
    %70 = vmatprep.subr.mxu0 0.0
    %71 = vmatpush1.msra.mxu0 %v51
    %72 = vmatprep.subr.mxu0 0.0
    %73 = vmatpush1.msra.mxu0 %v50
    %74 = vmatprep.subr.mxu0 0.0
    %75 = vmatpush1.msra.mxu0 %v49
    %76 = vmatprep.subr.mxu0 0.0
    %77 = vmatpush1.msra.mxu0 %v48
    %78 = vmatprep.subr.mxu0 0.0
    %79 = vmatpush1.msra.mxu0 %v47
    %80 = vmatprep.subr.mxu0 0.0
    %81 = vmatpush1.msra.mxu0 %v46
    %82 = vmatprep.subr.mxu0 0.0
    %83 = vmatpush1.msra.mxu0 %v45
    %84 = vmatprep.subr.mxu0 0.0
    %85 = vmatpush1.msra.mxu0 %v44
    %86 = vmatprep.subr.mxu0 0.0
    %87 = vmatpush1.msra.mxu0 %v43
    %88 = vmatprep.subr.mxu0 0.0
    %89 = vmatpush1.msra.mxu0 %v42
    %90 = vmatprep.subr.mxu0 0.0
    %91 = vmatpush2.msra.mxu0 0.0
    %92 = vmatprep.subr.mxu0 0.0
    %93 = vmatpush2.msra.mxu0 0.0
    %94 = vmatprep.subr.mxu0 0.0
    %95 = vmatpush2.msra.mxu0 0.0
    %96 = vmatprep.subr.mxu0 0.0
    %97 = vmatpush2.msra.mxu0 0.0
    %98 = vmatprep.subr.mxu0 0.0
    %99 = vmatpush2.msra.mxu0 0.0
    %100 = vmatprep.subr.mxu0 0.0
    %101 = vmatpush2.msra.mxu0 0.0
    %102 = vmatprep.subr.mxu0 0.0
    %103 = vmatpush2.msra.mxu0 0.0
    %104 = vmatprep.subr.mxu0 0.0
    %105 = vmatpush2.msra.mxu0 0.0
    %106 = vmatprep.subr.mxu0 0.0
    %107 = vmatpush2.msra.mxu0 0.0
    %108 = vmatprep.subr.mxu0 0.0
    %109 = vmatpush2.msra.mxu0 0.0
    %110 = vmatprep.subr.mxu0 0.0
    %111 = vmatpush2.msra.mxu0 0.0
    %112 = vmatprep.subr.mxu0 0.0
    %113 = vmatpush2.msra.mxu0 0.0
    %114 = vmatprep.subr.mxu0 0.0
    %115 = vmatpush2.msra.mxu0 0.0
    %116 = vmatprep.subr.mxu0 0.0
    %117 = vmatpush2.msra.mxu0 0.0
    %118 = vmatprep.subr.mxu0 0.0
    %119 = vmatpush2.msra.mxu0 0.0
    %120 = vmatprep.subr.mxu0 0.0
    %121 = vmatpush2.msra.mxu0 0.0
    %122 = vmatprep.mubr.f32.mxu0 0.0
    %123 = vmatmul.mubr.f32.gmra.mxu0 %v41
    %v124 = vpop.f32.mrf.mxu0
    %v125 = vadd.f32 0.0, %v124
    %v126 = vpop.f32.mrf.mxu0
    %127 = vdwg.mxu0
    %p128 = scmp.eq.s32.totalorder 0, 0
    // Predicated region
    $region22: #{tpu_custom_call.1} parent=1 // pred_check
      %p129 = pneg %p128
    $region23: #{tpu_custom_call.1} parent=1 // pred_check_branch
      %131 = sbr.rel (%p129) target = $region25
    $region24: #{tpu_custom_call.1} parent=1 // pred_region
      %132 = vst [vmem:[#allocation7] sm:$0xff] %v125
    $region25: #{tpu_custom_call.1} parent=1 // pred_fallthru
      _
    %p133 = scmp.ne.s32.totalorder 0, 0
    // Predicated region
    $region26: #{tpu_custom_call.1} parent=1 // pred_check
      %p134 = pneg %p133
    $region27: #{tpu_custom_call.1} parent=1 // pred_check_branch
      %136 = sbr.rel (%p134) target = $region29
    $region28: #{tpu_custom_call.1} parent=1 // pred_region
      %v137 = vld [vmem:[#allocation7] sm:$0xff]
      %v138 = vadd.f32 %v137, %v125
      %139 = vst [vmem:[#allocation7] sm:$0xff] %v138
    $region29: #{tpu_custom_call.1} parent=1 // pred_fallthru
      _
    // Predicated region
    $region30: #{tpu_custom_call.1} parent=1 // pred_check
      %p140 = pneg %p128
    $region31: #{tpu_custom_call.1} parent=1 // pred_check_branch
      %142 = sbr.rel (%p140) target = $region33
    $region32: #{tpu_custom_call.1} parent=1 // pred_region
      %v143 = vld [vmem:[#allocation7] sm:$0xff]
      %v144 = vld [vmem:[%s2] sm:$0x1]
      %v146 = vlaneseq
      %v147 = vshrl.u32 %v146, 7
      %v148 = vsub.s32 0, %v147
      %v149 = vrot.slane %v144, %v148
      %v151 = vadd.f32 %v143, %v149
      %152 = vst [vmem:[#allocation7] sm:$0xff] %v151
    $region33: #{tpu_custom_call.1} parent=1 // pred_fallthru
      _
    // Predicated region
    $region34: #{tpu_custom_call.1} parent=1 // pred_check
      _
    $region35: #{tpu_custom_call.1} parent=1 // pred_check_branch
      %154 = sbr.rel (0) target = $region37
    $region36: #{tpu_custom_call.1} parent=1 // pred_region
      %s156 = ssub.s32 128, 128
      %157 = vsyncadd [#allocation4], %s156
      %s159 = sshll.u32 [#allocation7], 4
      %s160 = int_to_ptr.vmem [resolvable:$true] %s159
      %162 = dma.vmem_to_hbm [thread:$0]  %s160, 128, %s3, [#allocation4]
    $region37: #{tpu_custom_call.1} parent=1 // pred_fallthru
      _
    // Predicated region
    $region38: #{tpu_custom_call.1} parent=1 // pred_check
      _
    $region39: #{tpu_custom_call.1} parent=1 // pred_check_branch
      %164 = sbr.rel (0) target = $region41
    $region40: #{tpu_custom_call.1} parent=1 // pred_region
      %165 = dma.done [#allocation4], 128
    $region41: #{tpu_custom_call.1} parent=1 // pred_fallthru
      _
    %166 = vsyncpa [#allocation3], 1
    %167 = vsyncpa [#allocation6], 1
    %168 = vsyncpa [#allocation4], 1

</llo_original>
